<compile_context>
chip_gen: v6e
topology: v6e:2x2x1
jax: 0.10.0
libtpu: 0.0.40
codegen_flags: <defaults>
</compile_context>

<pallas_src>
import functools

import jax
import jax.numpy as jnp
from jax.experimental import pallas as pl
from jax.experimental.pallas import tpu as pltpu

LANE = 128  # lane-pad the folded head so the final store is lane-dense


def _round_up(n, m):
    return ((n + m - 1) // m) * m


def dueldqn_kernel(x_ref, p1_ref, p2_ref, q_ref, *, n_obs, rb, rp, dim, rb2):
    """p1_ref packs [W_proj^T | b_proj | pos_emb] (sublane-aligned rows),
    p2_ref packs [W_folded | b_folded] (lane-padded to 128 columns)."""
    L = x_ref.shape[0]
    # projection: Linear(n_obs, dim) + ReLU, then add positional embedding.
    h = jnp.dot(x_ref[...], p1_ref[0:n_obs, :],
                preferred_element_type=jnp.float32)
    h = jnp.maximum(h + p1_ref[rb:rb + 1, :], 0.0) + p1_ref[rp:rp + L, :]
    # folded (encoder1 + encoder2 + dueling head): one lane-dense matmul.
    q_ref[...] = (
        jnp.dot(h, p2_ref[0:dim, :], preferred_element_type=jnp.float32)
        + p2_ref[rb2:rb2 + 1, :]
    )


def fold_params(params):
    """One-time parameter preprocessing (plain jnp, outside the kernel)."""
    f32 = jnp.float32
    t = jnp.transpose
    dim, n_obs = params["w_proj"].shape
    L = params["pos_emb"].shape[0]
    A = params["w_adv"].shape[0]

    # value slice of the packed q/k/v in_proj (q/k never reach the output).
    wv1 = t(params["in_proj_w1"][2 * dim:3 * dim])
    bv1 = params["in_proj_b1"][2 * dim:3 * dim]
    wo1 = t(params["out_proj_w1"])
    bo1 = params["out_proj_b1"]
    wv2 = t(params["in_proj_w2"][2 * dim:3 * dim])
    bv2 = params["in_proj_b2"][2 * dim:3 * dim]
    wo2 = t(params["out_proj_w2"])
    bo2 = params["out_proj_b2"]

    # attention-with-one-key + residual is affine:  h -> h @ (I + Wv Wo) + c
    eye = jnp.eye(dim, dtype=f32)
    blk1 = eye + wv1 @ wo1
    c1 = bv1 @ wo1 + bo1
    blk2 = eye + wv2 @ wo2
    c2 = bv2 @ wo2 + bo2
    enc_w = blk1 @ blk2            # both encoder blocks composed
    enc_b = c1 @ blk2 + c2

    # dueling head:  q = (adv - mean(adv)) + val = adv @ C + val @ 1_{1xA}
    C = jnp.eye(A, dtype=f32) - jnp.ones((A, A), f32) / A
    ones_row = jnp.ones((1, A), f32)
    head_w = t(params["w_adv"]) @ C + t(params["w_val"]) @ ones_row   # (dim, A)
    head_b = params["b_adv"] @ C + params["b_val"] @ ones_row         # (A,)

    w_big = enc_w @ head_w                 # (dim, A)
    b_big = enc_b @ head_w + head_b        # (A,)

    # Tile 1: projection weight (rows 0..n_obs-1), bias (row rb),
    #         positional embedding (rows rp..rp+L-1); sublane-aligned offsets.
    rb = _round_up(n_obs, 8)
    rp = _round_up(rb + 1, 8)
    rows1 = _round_up(rp + L, 8)
    p1 = jnp.zeros((rows1, dim), f32)
    p1 = p1.at[:n_obs].set(t(params["w_proj"]))
    p1 = p1.at[rb].set(params["b_proj"])
    p1 = p1.at[rp:rp + L].set(params["pos_emb"])

    # Tile 2: folded head weight (rows 0..dim-1) and bias (row rb2),
    #         lane-padded to 128 output columns (padding columns are 0).
    rb2 = _round_up(dim, 8)
    rows2 = _round_up(rb2 + 1, 8)
    p2 = jnp.zeros((rows2, LANE), f32)
    p2 = p2.at[:dim, :A].set(w_big)
    p2 = p2.at[rb2, :A].set(b_big)

    return {
        "p1": p1, "p2": p2,
        "n_obs": n_obs, "rb": rb, "rp": rp, "dim": dim, "rb2": rb2,
        "n_actions": A,
    }


def duel_dqn_forward(x, params):
    """Fold parameters (cacheable across calls), then run one grid-less
    VMEM-resident pallas_call: 3 input refs, 2 MXU passes, lane-dense
    (L, 128) output, sliced back to (L, n_actions)."""
    folded = fold_params(params)   # in real use, cache this across calls
    L = x.shape[0]
    n_actions = folded["n_actions"]
    vmem = pl.BlockSpec(memory_space=pltpu.MemorySpace.VMEM)
    kernel = functools.partial(
        dueldqn_kernel,
        n_obs=folded["n_obs"], rb=folded["rb"], rp=folded["rp"],
        dim=folded["dim"], rb2=folded["rb2"],
    )
    q_pad = pl.pallas_call(
        kernel,
        out_shape=jax.ShapeDtypeStruct((L, LANE), jnp.float32),
        in_specs=[vmem] * 3,
        out_specs=vmem,
    )(x, folded["p1"], folded["p2"])
    return q_pad[:, :n_actions]


def reference_forward(x, params, num_heads=8):
    """Pure-JAX reference mirroring the PyTorch forward exactly (including the
    LayerNorm'd query and the full per-head softmax attention)."""
    dim = params["w_proj"].shape[0]
    h = jnp.maximum(x @ params["w_proj"].T + params["b_proj"], 0.0) + params["pos_emb"]

    def layernorm(y, g, b, eps=1e-5):
        mu = y.mean(-1, keepdims=True)
        var = ((y - mu) ** 2).mean(-1, keepdims=True)
        return (y - mu) / jnp.sqrt(var + eps) * g + b

    def mha(q_in, kv_in, wi, bi, wo, bo):
        L = q_in.shape[0]
        q = q_in @ wi[:dim].T + bi[:dim]
        k = kv_in @ wi[dim:2 * dim].T + bi[dim:2 * dim]
        v = kv_in @ wi[2 * dim:].T + bi[2 * dim:]
        hd = dim // num_heads
        qh = q.reshape(L, num_heads, hd)
        kh = k.reshape(L, num_heads, hd)
        vh = v.reshape(L, num_heads, hd)
        scores = (qh * kh).sum(-1) / jnp.sqrt(hd)         # (L, H) — one key each
        w = jax.nn.softmax(scores[..., None], axis=-1)    # == 1 everywhere
        out = (w * vh).reshape(L, dim)
        return out @ wo.T + bo

    r1 = h
    h = mha(layernorm(h, params["ln1_g"], params["ln1_b"]), h,
            params["in_proj_w1"], params["in_proj_b1"],
            params["out_proj_w1"], params["out_proj_b1"]) + r1
    r2 = h
    h = mha(layernorm(h, params["ln2_g"], params["ln2_b"]), h,
            params["in_proj_w2"], params["in_proj_b2"],
            params["out_proj_w2"], params["out_proj_b2"]) + r2
    adv = h @ params["w_adv"].T + params["b_adv"]
    val = h @ params["w_val"].T + params["b_val"]
    return val + (adv - adv.mean(1, keepdims=True))


def init_params(key, n_obs, n_actions, max_seq, dim):
    ks = jax.random.split(key, 16)
    s = 0.1

    def rn(k, shape):
        return s * jax.random.normal(k, shape, dtype=jnp.float32)

    return {
        "w_proj": rn(ks[0], (dim, n_obs)),
        "b_proj": rn(ks[1], (dim,)),
        "pos_emb": rn(ks[2], (max_seq, dim)),
        # LayerNorms use PyTorch default init (weight=1, bias=0); they only
        # touch the attention query, which cannot affect the output here.
        "ln1_g": jnp.ones((dim,), jnp.float32),
        "ln1_b": jnp.zeros((dim,), jnp.float32),
        "in_proj_w1": rn(ks[3], (3 * dim, dim)),
        "in_proj_b1": rn(ks[4], (3 * dim,)),
        "out_proj_w1": rn(ks[5], (dim, dim)),
        "out_proj_b1": rn(ks[6], (dim,)),
        "ln2_g": jnp.ones((dim,), jnp.float32),
        "ln2_b": jnp.zeros((dim,), jnp.float32),
        "in_proj_w2": rn(ks[7], (3 * dim, dim)),
        "in_proj_b2": rn(ks[8], (3 * dim,)),
        "out_proj_w2": rn(ks[9], (dim, dim)),
        "out_proj_b2": rn(ks[10], (dim,)),
        "w_adv": rn(ks[11], (n_actions, dim)),
        "b_adv": rn(ks[12], (n_actions,)),
        "w_val": rn(ks[13], (1, dim)),
        "b_val": rn(ks[14], (1,)),
    }


if __name__ == "__main__":
    n_observations, n_actions, max_seq_length, dim = 16, 4, 8, 32

    key = jax.random.PRNGKey(0)
    kx, kp = jax.random.split(key)
    x = jax.random.normal(kx, (max_seq_length, n_observations), dtype=jnp.float32)
    params = init_params(kp, n_observations, n_actions, max_seq_length, dim)

    qval = jax.block_until_ready(duel_dqn_forward(x, params))
    qref = reference_forward(x, params)

    assert qval.shape == (max_seq_length, n_actions)
    assert jnp.allclose(qval, qref, atol=1e-4, rtol=1e-4), (
        f"max abs err {jnp.max(jnp.abs(qval - qref))}")
    print("KERNEL_OK")
</pallas_src>

<mosaic_0001>
module attributes {stable_mosaic.version = 11 : i64} {
  func.func @dueldqn_kernel(%arg0: memref<8x16xf32, #tpu.memory_space<vmem>>, %arg1: memref<32x32xf32, #tpu.memory_space<vmem>>, %arg2: memref<40x128xf32, #tpu.memory_space<vmem>>, %arg3: memref<8x128xf32, #tpu.memory_space<vmem>>) attributes {dimension_semantics = [], scalar_prefetch = 0 : i64, scratch_operands = 0 : i64, tpu.core_type = #tpu.core_type<tc>} {
    %c0 = arith.constant 0 : index
    %c0_0 = arith.constant 0 : index
    %0 = vector.load %arg0[%c0, %c0_0] : memref<8x16xf32, #tpu.memory_space<vmem>>, vector<8x16xf32>
    %c0_1 = arith.constant 0 : index
    %c0_2 = arith.constant 0 : index
    %1 = vector.load %arg1[%c0_1, %c0_2] : memref<32x32xf32, #tpu.memory_space<vmem>>, vector<16x32xf32>
    %cst = arith.constant dense<0.000000e+00> : vector<8x32xf32>
    %2 = tpu.matmul %0, %1, %cst {dimension_numbers = #tpu.dot_dimension_numbers<[1], [0], [0], [1], [0, 0, 1, 1], [], []>} : vector<8x16xf32>, vector<16x32xf32>, vector<8x32xf32> -> vector<8x32xf32>
    %c16 = arith.constant 16 : index
    %c0_3 = arith.constant 0 : index
    %3 = vector.load %arg1[%c16, %c0_3] : memref<32x32xf32, #tpu.memory_space<vmem>>, vector<1x32xf32>
    %4 = vector.broadcast %3 : vector<1x32xf32> to vector<8x32xf32>
    %5 = arith.addf %2, %4 : vector<8x32xf32>
    %cst_4 = arith.constant 0.000000e+00 : f32
    %6 = vector.broadcast %cst_4 : f32 to vector<8x32xf32>
    %7 = arith.maximumf %5, %6 : vector<8x32xf32>
    %c24 = arith.constant 24 : index
    %c0_5 = arith.constant 0 : index
    %8 = vector.load %arg1[%c24, %c0_5] : memref<32x32xf32, #tpu.memory_space<vmem>>, vector<8x32xf32>
    %9 = arith.addf %7, %8 : vector<8x32xf32>
    %c0_6 = arith.constant 0 : index
    %c0_7 = arith.constant 0 : index
    %10 = vector.load %arg2[%c0_6, %c0_7] : memref<40x128xf32, #tpu.memory_space<vmem>>, vector<32x128xf32>
    %cst_8 = arith.constant dense<0.000000e+00> : vector<8x128xf32>
    %11 = tpu.matmul %9, %10, %cst_8 {dimension_numbers = #tpu.dot_dimension_numbers<[1], [0], [0], [1], [0, 0, 1, 1], [], []>} : vector<8x32xf32>, vector<32x128xf32>, vector<8x128xf32> -> vector<8x128xf32>
    %c32 = arith.constant 32 : index
    %c0_9 = arith.constant 0 : index
    %12 = vector.load %arg2[%c32, %c0_9] : memref<40x128xf32, #tpu.memory_space<vmem>>, vector<1x128xf32>
    %13 = vector.broadcast %12 : vector<1x128xf32> to vector<8x128xf32>
    %14 = arith.addf %11, %13 : vector<8x128xf32>
    %c0_10 = arith.constant 0 : index
    %c0_11 = arith.constant 0 : index
    %15 = vector.load %arg3[%c0_10, %c0_11] : memref<8x128xf32, #tpu.memory_space<vmem>>, vector<8x128xf32>
    tpu.vector_store %arg3[%c0_10, %c0_11], %14 {strides = array<i32>} : memref<8x128xf32, #tpu.memory_space<vmem>>, vector<8x128xf32>,
    return
  }
}

</mosaic_0001>

<llo_original>
// kernel: tpu_custom_call.1
$region0: #{tpu_custom_call.1}
  #allocation0 [shape = 'u32[]', space=smem, size = 0x4, offset = 0x4, fixed_abs, tag = 'smem constant byte address 0x4 - core index']
  #allocation1 [shape = 'u32[144,128]{1,0:T(1,128)}', space=vmem, size = 0x12000, scoped, tag = 'internal scratch']
  %s0 = inlined_call_operand.hbm [shape: f32[8,16], index: 0, kind: input, shape index: {}]
  %s1 = inlined_call_operand.hbm [shape: f32[32,32], index: 1, kind: input, shape index: {}]
  %s2 = inlined_call_operand.hbm [shape: f32[40,128], index: 2, kind: input, shape index: {}]
  %s3 = inlined_call_operand.hbm [shape: f32[8,128], index: 3, kind: output, shape index: {}]
  %s4 = sld [smem:[#allocation0]]
  $region34: #{tpu_custom_call.1} parent=0
    _
  %s6 = ssub.s32 1, %s4
  %s7 = scalar_select 0, %s6, %s4
  $region1: #{tpu_custom_call.1} parent=0
    #allocation2 [shape = 'u8[4096]{0}', space=vmem, size = 0x1000, scoped, tag = 'input window, operand 0, single buffered']
    #allocation3 [shape = 's32[1]{0}', space=sflag, size = 0x4, scoped, tag = 'scoped memory for tpu_custom_call.1']
    #allocation4 [shape = 's32[1]{0}', space=sflag, size = 0x4, scoped, tag = 'scoped memory for tpu_custom_call.1']
    #allocation5 [shape = 'u8[16384]{0}', space=vmem, size = 0x4000, scoped, tag = 'input window, operand 1, single buffered']
    #allocation6 [shape = 's32[1]{0}', space=sflag, size = 0x4, scoped, tag = 'scoped memory for tpu_custom_call.1']
    #allocation7 [shape = 'u8[20480]{0}', space=vmem, size = 0x5000, scoped, tag = 'input window, operand 2, single buffered']
    #allocation8 [shape = 'u8[4096]{0}', space=vmem, size = 0x1000, scoped, tag = 'output window, operand 0, single buffered']
    %8 = vsyncpa [#allocation3], 0
    %9 = vsyncpa [#allocation6], 0
    %10 = vsyncpa [#allocation4], 0
    // Predicated region
    $region2: #{tpu_custom_call.1} parent=1 // pred_check
      _
    $region3: #{tpu_custom_call.1} parent=1 // pred_check_branch
      %12 = sbr.rel (0) target = $region5
    $region4: #{tpu_custom_call.1} parent=1 // pred_region
      %s14 = ssub.s32 128, 128
      %15 = vsyncadd [#allocation3], %s14
      %s17 = sshll.u32 [#allocation2], 4
      %s18 = int_to_ptr.vmem [resolvable:$true] %s17
      %20 = dma.hbm_to_vmem [thread:$0]  %s0, 128, %s18, [#allocation3]
    $region5: #{tpu_custom_call.1} parent=1 // pred_fallthru
      _
    // Predicated region
    $region6: #{tpu_custom_call.1} parent=1 // pred_check
      _
    $region7: #{tpu_custom_call.1} parent=1 // pred_check_branch
      %22 = sbr.rel (0) target = $region9
    $region8: #{tpu_custom_call.1} parent=1 // pred_region
      %s24 = ssub.s32 512, 512
      %25 = vsyncadd [#allocation6], %s24
      %s26 = sshll.u32 [#allocation5], 4
      %s27 = int_to_ptr.vmem [resolvable:$true] %s26
      %32 = dma.hbm_to_vmem [thread:$0]  %s1, 512, %s27, [#allocation6], 128, 128, 8
    $region9: #{tpu_custom_call.1} parent=1 // pred_fallthru
      _
    // Predicated region
    $region10: #{tpu_custom_call.1} parent=1 // pred_check
      _
    $region11: #{tpu_custom_call.1} parent=1 // pred_check_branch
      %34 = sbr.rel (0) target = $region13
    $region12: #{tpu_custom_call.1} parent=1 // pred_region
      %s36 = ssub.s32 640, 640
      %37 = vsyncadd [#allocation6], %s36
      %s38 = sshll.u32 [#allocation7], 4
      %s39 = int_to_ptr.vmem [resolvable:$true] %s38
      %44 = dma.hbm_to_vmem [thread:$0]  %s2, 640, %s39, [#allocation6], 128, 128, 8
    $region13: #{tpu_custom_call.1} parent=1 // pred_fallthru
      _
    // Predicated region
    $region14: #{tpu_custom_call.1} parent=1 // pred_check
      _
    $region15: #{tpu_custom_call.1} parent=1 // pred_check_branch
      %46 = sbr.rel (0) target = $region17
    $region16: #{tpu_custom_call.1} parent=1 // pred_region
      %47 = dma.done [#allocation3], 128
    $region17: #{tpu_custom_call.1} parent=1 // pred_fallthru
      _
    // Predicated region
    $region18: #{tpu_custom_call.1} parent=1 // pred_check
      _
    $region19: #{tpu_custom_call.1} parent=1 // pred_check_branch
      %49 = sbr.rel (0) target = $region21
    $region20: #{tpu_custom_call.1} parent=1 // pred_region
      %50 = dma.done [#allocation6], 512
    $region21: #{tpu_custom_call.1} parent=1 // pred_fallthru
      _
    // Predicated region
    $region22: #{tpu_custom_call.1} parent=1 // pred_check
      _
    $region23: #{tpu_custom_call.1} parent=1 // pred_check_branch
      %52 = sbr.rel (0) target = $region25
    $region24: #{tpu_custom_call.1} parent=1 // pred_region
      %53 = dma.done [#allocation6], 640
    $region25: #{tpu_custom_call.1} parent=1 // pred_fallthru
      _
    %v54 = vld [vmem:[#allocation2] sm:$0xff]
    %v55 = vld [vmem:[#allocation5] sm:$0xff]
    %v56 = vld [vmem:[#allocation5 + $0x8] sm:$0xff]
    %v57 = vld [vmem:[#allocation5 + $0x10] sm:$0x1]
    %v58 = vlaneseq
    %v59 = vshrl.u32 %v58, 7
    %v60 = vsub.s32 0, %v59
    %v61 = vrot.slane %v57, %v60
    %vm62 = vcmask 130048
    %v64 = vsel %vm62, %v54, 0
    %66 = vmatprep.subr.mxu0 0.0
    %67 = vmatpush1.msra.mxu0 0.0
    %68 = vmatprep.subr.mxu0 0.0
    %69 = vmatpush1.msra.mxu0 0.0
    %70 = vmatprep.subr.mxu0 0.0
    %71 = vmatpush1.msra.mxu0 0.0
    %72 = vmatprep.subr.mxu0 0.0
    %73 = vmatpush1.msra.mxu0 0.0
    %74 = vmatprep.subr.mxu0 0.0
    %75 = vmatpush1.msra.mxu0 0.0
    %76 = vmatprep.subr.mxu0 0.0
    %77 = vmatpush1.msra.mxu0 0.0
    %78 = vmatprep.subr.mxu0 0.0
    %79 = vmatpush1.msra.mxu0 0.0
    %80 = vmatprep.subr.mxu0 0.0
    %81 = vmatpush1.msra.mxu0 0.0
    %82 = vmatprep.subr.mxu0 0.0
    %83 = vmatpush1.msra.mxu0 0.0
    %84 = vmatprep.subr.mxu0 0.0
    %85 = vmatpush1.msra.mxu0 0.0
    %86 = vmatprep.subr.mxu0 0.0
    %87 = vmatpush1.msra.mxu0 0.0
    %88 = vmatprep.subr.mxu0 0.0
    %89 = vmatpush1.msra.mxu0 0.0
    %90 = vmatprep.subr.mxu0 0.0
    %91 = vmatpush1.msra.mxu0 0.0
    %92 = vmatprep.subr.mxu0 0.0
    %93 = vmatpush1.msra.mxu0 0.0
    %94 = vmatprep.subr.mxu0 0.0
    %95 = vmatpush1.msra.mxu0 %v56
    %96 = vmatprep.subr.mxu0 0.0
    %97 = vmatpush1.msra.mxu0 %v55
    %98 = vmatprep.subr.mxu0 0.0
    %99 = vmatpush2.msra.mxu0 0.0
    %100 = vmatprep.subr.mxu0 0.0
    %101 = vmatpush2.msra.mxu0 0.0
    %102 = vmatprep.subr.mxu0 0.0
    %103 = vmatpush2.msra.mxu0 0.0
    %104 = vmatprep.subr.mxu0 0.0
    %105 = vmatpush2.msra.mxu0 0.0
    %106 = vmatprep.subr.mxu0 0.0
    %107 = vmatpush2.msra.mxu0 0.0
    %108 = vmatprep.subr.mxu0 0.0
    %109 = vmatpush2.msra.mxu0 0.0
    %110 = vmatprep.subr.mxu0 0.0
    %111 = vmatpush2.msra.mxu0 0.0
    %112 = vmatprep.subr.mxu0 0.0
    %113 = vmatpush2.msra.mxu0 0.0
    %114 = vmatprep.subr.mxu0 0.0
    %115 = vmatpush2.msra.mxu0 0.0
    %116 = vmatprep.subr.mxu0 0.0
    %117 = vmatpush2.msra.mxu0 0.0
    %118 = vmatprep.subr.mxu0 0.0
    %119 = vmatpush2.msra.mxu0 0.0
    %120 = vmatprep.subr.mxu0 0.0
    %121 = vmatpush2.msra.mxu0 0.0
    %122 = vmatprep.subr.mxu0 0.0
    %123 = vmatpush2.msra.mxu0 0.0
    %124 = vmatprep.subr.mxu0 0.0
    %125 = vmatpush2.msra.mxu0 0.0
    %126 = vmatprep.subr.mxu0 0.0
    %127 = vmatpush2.msra.mxu0 0.0
    %128 = vmatprep.subr.mxu0 0.0
    %129 = vmatpush2.msra.mxu0 0.0
    %130 = vmatprep.mubr.f32.mxu0 0.0
    %131 = vmatmul.mubr.f32.gmra.mxu0 %v64
    %v132 = vpop.f32.mrf.mxu0
    %v133 = vadd.f32 %v61, %v132
    %v134 = vpop.f32.mrf.mxu0
    %135 = vdwg.mxu0
    %v136 = vmax.f32 %v133, 0.0
    %v137 = vld [vmem:[#allocation5 + $0x18] sm:$0xff]
    %v138 = vadd.f32 %v136, %v137
    %v139 = vld [vmem:[#allocation7] sm:$0xff]
    %v140 = vld [vmem:[#allocation7 + $0x8] sm:$0xff]
    %v141 = vld [vmem:[#allocation7 + $0x10] sm:$0xff]
    %v142 = vld [vmem:[#allocation7 + $0x18] sm:$0xff]
    %v143 = vld [vmem:[#allocation7 + $0x20] sm:$0x1]
    %v144 = vlaneseq
    %v145 = vshrl.u32 %v144, 7
    %v146 = vsub.s32 0, %v145
    %v147 = vrot.slane %v143, %v146
    %vm148 = vcmask 261120
    %v150 = vsel %vm148, %v138, 0
    %152 = vmatprep.subr.mxu0 0.0
    %153 = vmatpush1.msra.mxu0 0.0
    %154 = vmatprep.subr.mxu0 0.0
    %155 = vmatpush1.msra.mxu0 0.0
    %156 = vmatprep.subr.mxu0 0.0
    %157 = vmatpush1.msra.mxu0 0.0
    %158 = vmatprep.subr.mxu0 0.0
    %159 = vmatpush1.msra.mxu0 0.0
    %160 = vmatprep.subr.mxu0 0.0
    %161 = vmatpush1.msra.mxu0 0.0
    %162 = vmatprep.subr.mxu0 0.0
    %163 = vmatpush1.msra.mxu0 0.0
    %164 = vmatprep.subr.mxu0 0.0
    %165 = vmatpush1.msra.mxu0 0.0
    %166 = vmatprep.subr.mxu0 0.0
    %167 = vmatpush1.msra.mxu0 0.0
    %168 = vmatprep.subr.mxu0 0.0
    %169 = vmatpush1.msra.mxu0 0.0
    %170 = vmatprep.subr.mxu0 0.0
    %171 = vmatpush1.msra.mxu0 0.0
    %172 = vmatprep.subr.mxu0 0.0
    %173 = vmatpush1.msra.mxu0 0.0
    %174 = vmatprep.subr.mxu0 0.0
    %175 = vmatpush1.msra.mxu0 0.0
    %176 = vmatprep.subr.mxu0 0.0
    %177 = vmatpush1.msra.mxu0 %v142
    %178 = vmatprep.subr.mxu0 0.0
    %179 = vmatpush1.msra.mxu0 %v141
    %180 = vmatprep.subr.mxu0 0.0
    %181 = vmatpush1.msra.mxu0 %v140
    %182 = vmatprep.subr.mxu0 0.0
    %183 = vmatpush1.msra.mxu0 %v139
    %184 = vmatprep.subr.mxu0 0.0
    %185 = vmatpush2.msra.mxu0 0.0
    %186 = vmatprep.subr.mxu0 0.0
    %187 = vmatpush2.msra.mxu0 0.0
    %188 = vmatprep.subr.mxu0 0.0
    %189 = vmatpush2.msra.mxu0 0.0
    %190 = vmatprep.subr.mxu0 0.0
    %191 = vmatpush2.msra.mxu0 0.0
    %192 = vmatprep.subr.mxu0 0.0
    %193 = vmatpush2.msra.mxu0 0.0
    %194 = vmatprep.subr.mxu0 0.0
    %195 = vmatpush2.msra.mxu0 0.0
    %196 = vmatprep.subr.mxu0 0.0
    %197 = vmatpush2.msra.mxu0 0.0
    %198 = vmatprep.subr.mxu0 0.0
    %199 = vmatpush2.msra.mxu0 0.0
    %200 = vmatprep.subr.mxu0 0.0
    %201 = vmatpush2.msra.mxu0 0.0
    %202 = vmatprep.subr.mxu0 0.0
    %203 = vmatpush2.msra.mxu0 0.0
    %204 = vmatprep.subr.mxu0 0.0
    %205 = vmatpush2.msra.mxu0 0.0
    %206 = vmatprep.subr.mxu0 0.0
    %207 = vmatpush2.msra.mxu0 0.0
    %208 = vmatprep.subr.mxu0 0.0
    %209 = vmatpush2.msra.mxu0 0.0
    %210 = vmatprep.subr.mxu0 0.0
    %211 = vmatpush2.msra.mxu0 0.0
    %212 = vmatprep.subr.mxu0 0.0
    %213 = vmatpush2.msra.mxu0 0.0
    %214 = vmatprep.subr.mxu0 0.0
    %215 = vmatpush2.msra.mxu0 0.0
    %216 = vmatprep.mubr.f32.mxu0 0.0
    %217 = vmatmul.mubr.f32.gmra.mxu0 %v150
    %v218 = vpop.f32.mrf.mxu0
    %v219 = vadd.f32 %v147, %v218
    %v220 = vpop.f32.mrf.mxu0
    %221 = vdwg.mxu0
    %222 = vst [vmem:[#allocation8] sm:$0xff] %v219
    // Predicated region
    $region26: #{tpu_custom_call.1} parent=1 // pred_check
      _
    $region27: #{tpu_custom_call.1} parent=1 // pred_check_branch
      %224 = sbr.rel (0) target = $region29
    $region28: #{tpu_custom_call.1} parent=1 // pred_region
      %s226 = ssub.s32 128, 128
      %227 = vsyncadd [#allocation4], %s226
      %s229 = sshll.u32 [#allocation8], 4
      %s230 = int_to_ptr.vmem [resolvable:$true] %s229
      %232 = dma.vmem_to_hbm [thread:$0]  %s230, 128, %s3, [#allocation4]
    $region29: #{tpu_custom_call.1} parent=1 // pred_fallthru
      _
    // Predicated region
    $region30: #{tpu_custom_call.1} parent=1 // pred_check
      _
    $region31: #{tpu_custom_call.1} parent=1 // pred_check_branch
      %234 = sbr.rel (0) target = $region33
    $region32: #{tpu_custom_call.1} parent=1 // pred_region
      %235 = dma.done [#allocation4], 128
    $region33: #{tpu_custom_call.1} parent=1 // pred_fallthru
      _
    %236 = vsyncpa [#allocation3], 1
    %237 = vsyncpa [#allocation6], 1
    %238 = vsyncpa [#allocation4], 1

</llo_original>
